<compile_context>
chip_gen: v5e
topology: v5e:2x2
jax: 0.10.0
libtpu: 0.0.40
codegen_flags: <defaults>
</compile_context>

<pallas_src>
from functools import partial

import jax
import jax.numpy as jnp
from jax.experimental import pallas as pl
from jax.experimental.pallas import tpu as pltpu


def mlp_kernel(xt_ref, w1t_ref, b1_ref, w2t_ref, b2_ref, ot_ref, *, use_bf16):
    # xt: (2, bb) f32 | w1t: (50, 2) f32 | b1: (50, 1) f32
    # w2t: (2, 50) f32/bf16 | b2: (2, 1) f32 | ot: (2, bb) f32
    xt = xt_ref[...]
    w1t = w1t_ref[...]

    # First layer (K=2): VPU broadcast-FMA over full 128-lane vregs, f32.
    # TODO(synk): the (1,bb)->(50,bb) sublane broadcast could be a stride-0
    # ds load; skipped as marginal once tanh is the per-element bottleneck.
    h = (w1t[:, 0:1] * xt[0:1, :]
         + w1t[:, 1:2] * xt[1:2, :]
         + b1_ref[...])                                   # (50, bb) f32

    if use_bf16:
        # v6e / v7x: bf16 EUP tanh (2x packed) + native bf16 MXU, f32 accum.
        h = jnp.tanh(h.astype(jnp.bfloat16))
    else:
        h = jnp.tanh(h)

    # Second layer (K=50): MXU matmul with f32 accumulation.
    y = jnp.dot(w2t_ref[...], h, preferred_element_type=jnp.float32)
    ot_ref[...] = (y + b2_ref[...]).astype(ot_ref.dtype)  # (2, bb)


def _choose_tile(batch, block_b):
    """Lane-aligned batch tile: multiple of 128; >=2 grid steps when possible."""
    bb = max(128, (int(block_b) // 128) * 128)
    b128 = pl.cdiv(batch, 128) * 128
    bb = min(bb, b128)
    if b128 >= 256:  # keep >= 2 grid steps so v7x can use both TensorCores
        bb = min(bb, max(128, (pl.cdiv(b128, 2) // 128) * 128))
    return bb


def _mlp_pallas_t(xt, w1t, b1c, w2t, b2c, *, block_b, use_bf16):
    """Core: X^T (2, B) f32 -> Y^T (2, B) f32, batch on the lane axis."""
    B = xt.shape[1]
    bb = _choose_tile(B, block_b)

    Bk = B
    if B < bb:                        # tiny batches: one lane-aligned block
        Bk = bb
        xt = jnp.pad(xt, ((0, 0), (0, bb - B)))
    grid = (pl.cdiv(Bk, bb),)         # ragged last block: Pallas masks writes

    resident = lambda a: pl.BlockSpec(a.shape, lambda i: (0,) * a.ndim)

    yt = pl.pallas_call(
        partial(mlp_kernel, use_bf16=use_bf16),
        out_shape=jax.ShapeDtypeStruct((2, Bk), xt.dtype),
        grid=grid,
        in_specs=[
            pl.BlockSpec((2, bb), lambda i: (0, i)),      # X^T batch tile
            resident(w1t),                                # weights stay in VMEM
            resident(b1c),
            resident(w2t),
            resident(b2c),
        ],
        out_specs=pl.BlockSpec((2, bb), lambda i: (0, i)),
        compiler_params=pltpu.CompilerParams(
            dimension_semantics=("parallel",)),
        cost_estimate=pl.CostEstimate(
            flops=400 * B, transcendentals=50 * B,
            bytes_accessed=16 * B + 1024),
    )(xt, w1t, b1c, w2t, b2c)

    return yt if Bk == B else yt[:, :B]


def _bf16_ok():
    """bf16 EUP/VPU/MXU path only helps on v6e / v7x (regression on v5e)."""
    kind = jax.devices()[0].device_kind.lower()
    return ("v6" in kind) or ("v7" in kind)


@partial(jax.jit, static_argnames=("block_b", "use_bf16"))
def mymodel_forward_t(xt, w1, b1, w2, b2, *, block_b=4096, use_bf16=None):
    """Transposed interface: xt (2, B) -> (2, B).  No wrapper relayout passes;
    prefer this entry point when adjacent ops can produce/consume (2, B)."""
    if use_bf16 is None:
        use_bf16 = _bf16_ok()
    w2t = w2.T.astype(jnp.bfloat16) if use_bf16 else w2.T
    return _mlp_pallas_t(xt, w1.T, b1.reshape(-1, 1), w2t, b2.reshape(-1, 1),
                         block_b=block_b, use_bf16=use_bf16)


@partial(jax.jit, static_argnames=("block_b", "use_bf16"))
def mymodel_forward(x, w1, b1, w2, b2, *, block_b=4096, use_bf16=None):
    """PyTorch-layout interface: x (B, 2) f32 -> (B, 2) f32.

    Weights are stored as (in_features, out_features) = W.T of the PyTorch
    nn.Linear weight: w1 (2, 50), b1 (50,), w2 (50, 2), b2 (2,).
    """
    return mymodel_forward_t(x.T, w1, b1, w2, b2,
                             block_b=block_b, use_bf16=use_bf16).T


def init_params(key):
    """Mimics nn.Linear's uniform(-1/sqrt(fan_in), 1/sqrt(fan_in)) init."""
    k1, k2, k3, k4 = jax.random.split(key, 4)
    lim1 = 1.0 / jnp.sqrt(2.0)    # fan_in = 2
    lim2 = 1.0 / jnp.sqrt(50.0)   # fan_in = 50
    # Stored as (in, out) == W.T of the PyTorch (out, in) weight.
    w1 = jax.random.uniform(k1, (2, 50), jnp.float32, -lim1, lim1)
    b1 = jax.random.uniform(k2, (50,), jnp.float32, -lim1, lim1)
    w2 = jax.random.uniform(k3, (50, 2), jnp.float32, -lim2, lim2)
    b2 = jax.random.uniform(k4, (2,), jnp.float32, -lim2, lim2)
    return w1, b1, w2, b2


def reference(x, w1, b1, w2, b2):
    return jnp.tanh(x @ w1 + b1) @ w2 + b2


if __name__ == "__main__":
    key = jax.random.PRNGKey(0)
    kx, kp = jax.random.split(key)
    w1, b1, w2, b2 = init_params(kp)

    use_bf16 = _bf16_ok()
    atol = 3e-2 if use_bf16 else 1e-5   # bf16 tanh/MXU path is ~1e-2 accurate

    # Small canonical case (batch=8): one padded 128-lane tile, single step.
    x_small = jax.random.normal(kx, (8, 2), jnp.float32)
    out_small = jax.block_until_ready(
        mymodel_forward(x_small, w1, b1, w2, b2, use_bf16=use_bf16))
    assert out_small.shape == (8, 2)
    assert jnp.allclose(out_small, reference(x_small, w1, b1, w2, b2),
                        atol=atol, rtol=0)

    # Multi-step ragged grid: 300 rows, 128-wide tiles -> 3 steps, masked tail
    # block (exercises the no-explicit-pad path).
    x_multi = jax.random.normal(kx, (300, 2), jnp.float32)
    out_multi = jax.block_until_ready(
        mymodel_forward(x_multi, w1, b1, w2, b2, block_b=128,
                        use_bf16=use_bf16))
    assert out_multi.shape == (300, 2)
    assert jnp.allclose(out_multi, reference(x_multi, w1, b1, w2, b2),
                        atol=atol, rtol=0)

    print("KERNEL_OK")
</pallas_src>

<mosaic_0001>
module attributes {stable_mosaic.version = 11 : i64} {
  func.func @mlp_kernel(%arg0: i32, %arg1: memref<2x128xf32, #tpu.memory_space<vmem>>, %arg2: memref<50x2xf32, #tpu.memory_space<vmem>>, %arg3: memref<50x1xf32, #tpu.memory_space<vmem>>, %arg4: memref<2x50xf32, #tpu.memory_space<vmem>>, %arg5: memref<2x1xf32, #tpu.memory_space<vmem>>, %arg6: memref<2x128xf32, #tpu.memory_space<vmem>>) attributes {dimension_semantics = [#tpu.dimension_semantics<parallel>], iteration_bounds = array<i64: 1>, scalar_prefetch = 0 : i64, scratch_operands = 0 : i64, tpu.core_type = #tpu.core_type<tc>, window_params = [{transform_indices = @transform_0, window_bounds = array<i64: 2, 128>}, {pipeline_mode = #tpu.pipeline_mode<synchronous>, transform_indices = @transform_1, window_bounds = array<i64: 50, 2>}, {pipeline_mode = #tpu.pipeline_mode<synchronous>, transform_indices = @transform_2, window_bounds = array<i64: 50, 1>}, {pipeline_mode = #tpu.pipeline_mode<synchronous>, transform_indices = @transform_3, window_bounds = array<i64: 2, 50>}, {pipeline_mode = #tpu.pipeline_mode<synchronous>, transform_indices = @transform_4, window_bounds = array<i64: 2, 1>}, {transform_indices = @transform_5, window_bounds = array<i64: 2, 128>}]} {
    %c0 = arith.constant 0 : index
    %c0_0 = arith.constant 0 : index
    %0 = vector.load %arg1[%c0, %c0_0] : memref<2x128xf32, #tpu.memory_space<vmem>>, vector<2x128xf32>
    %c0_1 = arith.constant 0 : index
    %c0_2 = arith.constant 0 : index
    %1 = vector.load %arg2[%c0_1, %c0_2] : memref<50x2xf32, #tpu.memory_space<vmem>>, vector<50x2xf32>
    %2 = vector.extract_strided_slice %1 {offsets = [0, 0], sizes = [50, 1], strides = [1, 1]} : vector<50x2xf32> to vector<50x1xf32>
    %3 = vector.extract_strided_slice %0 {offsets = [0, 0], sizes = [1, 128], strides = [1, 1]} : vector<2x128xf32> to vector<1x128xf32>
    %4 = vector.broadcast %2 : vector<50x1xf32> to vector<50x128xf32>
    %5 = vector.broadcast %3 : vector<1x128xf32> to vector<50x128xf32>
    %6 = arith.mulf %4, %5 : vector<50x128xf32>
    %7 = vector.extract_strided_slice %1 {offsets = [0, 1], sizes = [50, 1], strides = [1, 1]} : vector<50x2xf32> to vector<50x1xf32>
    %8 = vector.extract_strided_slice %0 {offsets = [1, 0], sizes = [1, 128], strides = [1, 1]} : vector<2x128xf32> to vector<1x128xf32>
    %9 = vector.broadcast %7 : vector<50x1xf32> to vector<50x128xf32>
    %10 = vector.broadcast %8 : vector<1x128xf32> to vector<50x128xf32>
    %11 = arith.mulf %9, %10 : vector<50x128xf32>
    %12 = arith.addf %6, %11 : vector<50x128xf32>
    %c0_3 = arith.constant 0 : index
    %c0_4 = arith.constant 0 : index
    %13 = vector.load %arg3[%c0_3, %c0_4] : memref<50x1xf32, #tpu.memory_space<vmem>>, vector<50x1xf32>
    %14 = vector.broadcast %13 : vector<50x1xf32> to vector<50x128xf32>
    %15 = arith.addf %12, %14 : vector<50x128xf32>
    %16 = math.tanh %15 : vector<50x128xf32>
    %c0_5 = arith.constant 0 : index
    %c0_6 = arith.constant 0 : index
    %17 = vector.load %arg4[%c0_5, %c0_6] : memref<2x50xf32, #tpu.memory_space<vmem>>, vector<2x50xf32>
    %cst = arith.constant dense<0.000000e+00> : vector<2x128xf32>
    %18 = tpu.matmul %17, %16, %cst {dimension_numbers = #tpu.dot_dimension_numbers<[1], [0], [0], [1], [0, 0, 1, 1], [], []>} : vector<2x50xf32>, vector<50x128xf32>, vector<2x128xf32> -> vector<2x128xf32>
    %c0_7 = arith.constant 0 : index
    %c0_8 = arith.constant 0 : index
    %19 = vector.load %arg5[%c0_7, %c0_8] : memref<2x1xf32, #tpu.memory_space<vmem>>, vector<2x1xf32>
    %20 = vector.broadcast %19 : vector<2x1xf32> to vector<2x128xf32>
    %21 = arith.addf %18, %20 : vector<2x128xf32>
    %c0_9 = arith.constant 0 : index
    %c0_10 = arith.constant 0 : index
    %22 = vector.load %arg6[%c0_9, %c0_10] : memref<2x128xf32, #tpu.memory_space<vmem>>, vector<2x128xf32>
    tpu.vector_store %arg6[%c0_9, %c0_10], %21 {strides = array<i32>} : memref<2x128xf32, #tpu.memory_space<vmem>>, vector<2x128xf32>,
    return
  }
  func.func @transform_0(%arg0: i32) -> (i32, i32) {
    %c0_i32 = arith.constant 0 : i32
    %c0_i32_0 = arith.constant 0 : i32
    return %c0_i32, %arg0 : i32, i32
  }
  func.func @transform_1(%arg0: i32) -> (i32, i32) {
    %c0_i32 = arith.constant 0 : i32
    %c0_i32_0 = arith.constant 0 : i32
    %c0_i32_1 = arith.constant 0 : i32
    return %c0_i32, %c0_i32_0 : i32, i32
  }
  func.func @transform_2(%arg0: i32) -> (i32, i32) {
    %c0_i32 = arith.constant 0 : i32
    %c0_i32_0 = arith.constant 0 : i32
    %c0_i32_1 = arith.constant 0 : i32
    return %c0_i32, %c0_i32_0 : i32, i32
  }
  func.func @transform_3(%arg0: i32) -> (i32, i32) {
    %c0_i32 = arith.constant 0 : i32
    %c0_i32_0 = arith.constant 0 : i32
    %c0_i32_1 = arith.constant 0 : i32
    return %c0_i32, %c0_i32_0 : i32, i32
  }
  func.func @transform_4(%arg0: i32) -> (i32, i32) {
    %c0_i32 = arith.constant 0 : i32
    %c0_i32_0 = arith.constant 0 : i32
    %c0_i32_1 = arith.constant 0 : i32
    return %c0_i32, %c0_i32_0 : i32, i32
  }
  func.func @transform_5(%arg0: i32) -> (i32, i32) {
    %c0_i32 = arith.constant 0 : i32
    %c0_i32_0 = arith.constant 0 : i32
    return %c0_i32, %arg0 : i32, i32
  }
}

</mosaic_0001>

<llo_original>
// kernel: mymodel_forward_t.1
$region0: #{mymodel_forward_t.1}
  #allocation0 [shape = 'u32[]', space=smem, size = 0x4, offset = 0x4, fixed_abs, tag = 'smem constant byte address 0x4 - core index']
  #allocation1 [shape = 'u32[72,128]{1,0:T(1,128)}', space=vmem, size = 0x9000, scoped, tag = 'internal scratch']
  %s0 = inlined_call_operand.vmem [shape: f32[2,128], index: 0, kind: input, shape index: {}]
  %s1 = inlined_call_operand.vmem [shape: f32[50,2], index: 1, kind: input, shape index: {}]
  %s2 = inlined_call_operand.vmem [shape: f32[50,1], index: 2, kind: input, shape index: {}]
  %s3 = inlined_call_operand.vmem [shape: f32[2,50], index: 3, kind: input, shape index: {}]
  %s4 = inlined_call_operand.vmem [shape: f32[2,1], index: 4, kind: input, shape index: {}]
  %s5 = inlined_call_operand.hbm [shape: f32[2,128], index: 5, kind: output, shape index: {}]
  %s6 = sld [smem:[#allocation0]]
  $region30: #{mymodel_forward_t.1} parent=0
    _
  %s8 = ssub.s32 1, %s6
  %s9 = scalar_select 0, %s8, %s6
  $region1: #{mymodel_forward_t.1} parent=0
    #allocation2 [shape = 'u8[1024]{0}', space=vmem, size = 0x400, scoped, tag = 'output window, operand 0, single buffered']
    #allocation3 [shape = 's32[1]{0}', space=sflag, size = 0x4, scoped, tag = 'scoped memory for mymodel_forward_t.1']
    %10 = vsyncpa [#allocation3], 0
    // Predicated region
    $region2: #{mymodel_forward_t.1} parent=1 // pred_check
      _
    $region3: #{mymodel_forward_t.1} parent=1 // pred_check_branch
      %12 = sbr.rel (0) target = $region5
    $region4: #{mymodel_forward_t.1} parent=1 // pred_region
      _
    $region5: #{mymodel_forward_t.1} parent=1 // pred_fallthru
      _
    // Predicated region
    $region6: #{mymodel_forward_t.1} parent=1 // pred_check
      _
    $region7: #{mymodel_forward_t.1} parent=1 // pred_check_branch
      %14 = sbr.rel (0) target = $region9
    $region8: #{mymodel_forward_t.1} parent=1 // pred_region
      _
    $region9: #{mymodel_forward_t.1} parent=1 // pred_fallthru
      _
    // Predicated region
    $region10: #{mymodel_forward_t.1} parent=1 // pred_check
      _
    $region11: #{mymodel_forward_t.1} parent=1 // pred_check_branch
      %16 = sbr.rel (0) target = $region13
    $region12: #{mymodel_forward_t.1} parent=1 // pred_region
      _
    $region13: #{mymodel_forward_t.1} parent=1 // pred_fallthru
      _
    // Predicated region
    $region14: #{mymodel_forward_t.1} parent=1 // pred_check
      _
    $region15: #{mymodel_forward_t.1} parent=1 // pred_check_branch
      %18 = sbr.rel (0) target = $region17
    $region16: #{mymodel_forward_t.1} parent=1 // pred_region
      _
    $region17: #{mymodel_forward_t.1} parent=1 // pred_fallthru
      _
    // Predicated region
    $region18: #{mymodel_forward_t.1} parent=1 // pred_check
      _
    $region19: #{mymodel_forward_t.1} parent=1 // pred_check_branch
      %20 = sbr.rel (0) target = $region21
    $region20: #{mymodel_forward_t.1} parent=1 // pred_region
      _
    $region21: #{mymodel_forward_t.1} parent=1 // pred_fallthru
      _
    %v21 = vld [vmem:[%s0] sm:$0x3]
    %v22 = vld [vmem:[%s1] sm:$0xff]
    %v23 = vld [vmem:[%s1 + $0x8] sm:$0xff]
    %v24 = vld [vmem:[%s1 + $0x10] sm:$0xff]
    %v25 = vld [vmem:[%s1 + $0x18] sm:$0xff]
    %v26 = vld [vmem:[%s1 + $0x20] sm:$0xff]
    %v27 = vld [vmem:[%s1 + $0x28] sm:$0xff]
    %v28 = vld [vmem:[%s1 + $0x30] sm:$0x3]
    %30 = vset.pattern.permute.xlu0 0
    %31 = vperm.xlu0 %30, %v22
    %v32 = vpop.permute.xlu0 %31
    %35 = vset.pattern.permute.xlu0 0
    %36 = vperm.xlu0 %35, %v23
    %v37 = vpop.permute.xlu0 %36
    %40 = vset.pattern.permute.xlu0 0
    %41 = vperm.xlu0 %40, %v24
    %v42 = vpop.permute.xlu0 %41
    %45 = vset.pattern.permute.xlu0 0
    %46 = vperm.xlu0 %45, %v25
    %v47 = vpop.permute.xlu0 %46
    %50 = vset.pattern.permute.xlu0 0
    %51 = vperm.xlu0 %50, %v26
    %v52 = vpop.permute.xlu0 %51
    %55 = vset.pattern.permute.xlu0 0
    %56 = vperm.xlu0 %55, %v27
    %v57 = vpop.permute.xlu0 %56
    %60 = vset.pattern.permute.xlu0 0
    %61 = vperm.xlu0 %60, %v28
    %v62 = vpop.permute.xlu0 %61
    %v64 = vperm.slane %v21, 0
    %v65 = vmul.f32 %v32, %v64
    %v66 = vmul.f32 %v37, %v64
    %v67 = vmul.f32 %v42, %v64
    %v68 = vmul.f32 %v47, %v64
    %v69 = vmul.f32 %v52, %v64
    %v70 = vmul.f32 %v57, %v64
    %v71 = vmul.f32 %v62, %v64
    %72 = vset.pattern.permute.xlu0 1
    %73 = vperm.xlu0 %72, %v22
    %v74 = vpop.permute.xlu0 %73
    %76 = vset.pattern.permute.xlu0 1
    %77 = vperm.xlu0 %76, %v23
    %v78 = vpop.permute.xlu0 %77
    %80 = vset.pattern.permute.xlu0 1
    %81 = vperm.xlu0 %80, %v24
    %v82 = vpop.permute.xlu0 %81
    %84 = vset.pattern.permute.xlu0 1
    %85 = vperm.xlu0 %84, %v25
    %v86 = vpop.permute.xlu0 %85
    %88 = vset.pattern.permute.xlu0 1
    %89 = vperm.xlu0 %88, %v26
    %v90 = vpop.permute.xlu0 %89
    %92 = vset.pattern.permute.xlu0 1
    %93 = vperm.xlu0 %92, %v27
    %v94 = vpop.permute.xlu0 %93
    %96 = vset.pattern.permute.xlu0 1
    %97 = vperm.xlu0 %96, %v28
    %v98 = vpop.permute.xlu0 %97
    %v100 = vperm.slane %v21, 1
    %v101 = vmul.f32 %v74, %v100
    %v102 = vmul.f32 %v78, %v100
    %v103 = vmul.f32 %v82, %v100
    %v104 = vmul.f32 %v86, %v100
    %v105 = vmul.f32 %v90, %v100
    %v106 = vmul.f32 %v94, %v100
    %v107 = vmul.f32 %v98, %v100
    %v108 = vadd.f32 %v65, %v101
    %v109 = vadd.f32 %v66, %v102
    %v110 = vadd.f32 %v67, %v103
    %v111 = vadd.f32 %v68, %v104
    %v112 = vadd.f32 %v69, %v105
    %v113 = vadd.f32 %v70, %v106
    %v114 = vadd.f32 %v71, %v107
    %v115 = vld [vmem:[%s2] sm:$0xff]
    %v116 = vld [vmem:[%s2 + $0x8] sm:$0xff]
    %v117 = vld [vmem:[%s2 + $0x10] sm:$0xff]
    %v118 = vld [vmem:[%s2 + $0x18] sm:$0xff]
    %v119 = vld [vmem:[%s2 + $0x20] sm:$0xff]
    %v120 = vld [vmem:[%s2 + $0x28] sm:$0xff]
    %v121 = vld [vmem:[%s2 + $0x30] sm:$0x3]
    %123 = vset.pattern.permute.xlu0 0
    %124 = vperm.xlu0 %123, %v115
    %v125 = vpop.permute.xlu0 %124
    %128 = vset.pattern.permute.xlu0 0
    %129 = vperm.xlu0 %128, %v116
    %v130 = vpop.permute.xlu0 %129
    %133 = vset.pattern.permute.xlu0 0
    %134 = vperm.xlu0 %133, %v117
    %v135 = vpop.permute.xlu0 %134
    %138 = vset.pattern.permute.xlu0 0
    %139 = vperm.xlu0 %138, %v118
    %v140 = vpop.permute.xlu0 %139
    %143 = vset.pattern.permute.xlu0 0
    %144 = vperm.xlu0 %143, %v119
    %v145 = vpop.permute.xlu0 %144
    %148 = vset.pattern.permute.xlu0 0
    %149 = vperm.xlu0 %148, %v120
    %v150 = vpop.permute.xlu0 %149
    %153 = vset.pattern.permute.xlu0 0
    %154 = vperm.xlu0 %153, %v121
    %v155 = vpop.permute.xlu0 %154
    %v157 = vadd.f32 %v108, %v125
    %v158 = vadd.f32 %v109, %v130
    %v159 = vadd.f32 %v110, %v135
    %v160 = vadd.f32 %v111, %v140
    %v161 = vadd.f32 %v112, %v145
    %v162 = vadd.f32 %v113, %v150
    %v163 = vadd.f32 %v114, %v155
    %v164 = vtanh.pop %v157
    %v165 = vtanh.pop %v158
    %v166 = vtanh.pop %v159
    %v167 = vtanh.pop %v160
    %v168 = vtanh.pop %v161
    %v169 = vtanh.pop %v162
    %v170 = vtanh.pop %v163
    %v171 = vld [vmem:[%s3] sm:$0x3]
    %v172 = vld [vmem:[%s4] sm:$0x3]
    %174 = vset.pattern.permute.xlu0 0
    %175 = vperm.xlu0 %174, %v172
    %v176 = vpop.permute.xlu0 %175
    %vm178 = vcmask 408576
    %v180 = vsel %vm178, %v171, 0
    %vm182 = vcmask 1041408
    %v184 = vsel %vm182, %v170, 0
    %186 = vmatpush.msra.mxu0 0.0
    %187 = vmatpush.msra.mxu0 0.0
    %188 = vmatpush.msra.mxu0 0.0
    %189 = vmatpush.msra.mxu0 0.0
    %190 = vmatpush.msra.mxu0 0.0
    %191 = vmatpush.msra.mxu0 0.0
    %192 = vmatpush.msra.mxu0 0.0
    %193 = vmatpush.msra.mxu0 0.0
    %194 = vmatpush.msra.mxu0 0.0
    %195 = vmatpush.msra.mxu0 %v184
    %196 = vmatpush.msra.mxu0 %v169
    %197 = vmatpush.msra.mxu0 %v168
    %198 = vmatpush.msra.mxu0 %v167
    %199 = vmatpush.msra.mxu0 %v166
    %200 = vmatpush.msra.mxu0 %v165
    %201 = vmatpush.msra.mxu0 %v164
    %202 = vmatmul.f32.gmra.mxu0 %v180
    %v203 = vpop.f32.mrf.mxu0
    %v204 = vadd.f32 %v176, %v203
    %205 = vdwg.mxu0
    %206 = vst [vmem:[#allocation2] sm:$0x3] %v204
    // Predicated region
    $region22: #{mymodel_forward_t.1} parent=1 // pred_check
      _
    $region23: #{mymodel_forward_t.1} parent=1 // pred_check_branch
      %208 = sbr.rel (0) target = $region25
    $region24: #{mymodel_forward_t.1} parent=1 // pred_region
      %210 = vsyncadd [#allocation3], 0
      %s212 = sshll.u32 [#allocation2], 4
      %s213 = int_to_ptr.vmem [resolvable:$true] %s212
      %s214 = sshll.u32 %s5, 4
      %s215 = int_to_ptr.hbm [resolvable:$true] %s214
      %217 = dma.vmem_to_hbm [thread:$0]  %s213, 32, %s215, [#allocation3]
    $region25: #{mymodel_forward_t.1} parent=1 // pred_fallthru
      _
    // Predicated region
    $region26: #{mymodel_forward_t.1} parent=1 // pred_check
      _
    $region27: #{mymodel_forward_t.1} parent=1 // pred_check_branch
      %219 = sbr.rel (0) target = $region29
    $region28: #{mymodel_forward_t.1} parent=1 // pred_region
      %221 = dma.done [#allocation3], 32
    $region29: #{mymodel_forward_t.1} parent=1 // pred_fallthru
      _
    %222 = vsyncpa [#allocation3], 1

</llo_original>
